<compile_context>
chip_gen: v7x
topology: tpu7x:2x2x1
jax: 0.10.0
libtpu: 0.0.40
codegen_flags: <defaults>
</compile_context>

<pallas_src>
import functools

import jax
import jax.numpy as jnp
from jax import lax
from jax.experimental import pallas as pl
from jax.experimental.pallas import tpu as pltpu


def _round_up(x, m):
    return (x + m - 1) // m * m


def _cdiv(a, b):
    return (a + b - 1) // b


# -----------------------------------------------------------------------------
# Kernels. Contraction is on the last dim of both x and W (PyTorch weight layout),
# so no transpose is needed anywhere; f32 accumulation on the MXU.
# -----------------------------------------------------------------------------
def _equal_linear_kernel(x_ref, w_ref, b_ref, o_ref, *, lr_mul):
    # x_ref: (tm, K)   w_ref: (tn, K)   b_ref: (1, tn)   o_ref: (tm, tn)
    acc = lax.dot_general(
        x_ref[...], w_ref[...],
        dimension_numbers=(((1,), (1,)), ((), ())),
        preferred_element_type=jnp.float32,
    )
    if lr_mul != 1.0:
        acc = acc * lr_mul
    # bias is already pre-scaled by lr_mul (f32) in the wrapper.
    o_ref[...] = (acc + b_ref[...]).astype(o_ref.dtype)


def _equal_linear_kernel_ktiled(x_ref, w_ref, b_ref, o_ref, acc_ref, *, lr_mul):
    # K (reduction) is the innermost ("arbitrary") grid axis; acc_ref is the resident
    # f32 accumulator for the current (i, j) output tile.
    k = pl.program_id(2)

    @pl.when(k == 0)
    def _():
        acc_ref[...] = jnp.zeros_like(acc_ref)

    acc_ref[...] += lax.dot_general(
        x_ref[...], w_ref[...],
        dimension_numbers=(((1,), (1,)), ((), ())),
        preferred_element_type=jnp.float32,
    )

    @pl.when(k == pl.num_programs(2) - 1)
    def _():
        acc = acc_ref[...]
        if lr_mul != 1.0:
            acc = acc * lr_mul
        o_ref[...] = (acc + b_ref[...]).astype(o_ref.dtype)


# -----------------------------------------------------------------------------
# Wrapper
# -----------------------------------------------------------------------------
def equal_linear(x, weight, bias=None, lr_mul=1.0, *,
                 compute_dtype=None,
                 tm=512, tn=512, tk=2048,
                 vmem_budget_bytes=28 * 1024 * 1024,
                 vmem_limit_bytes=32 * 1024 * 1024):
    """EqualLinear forward: y = F.linear(x, weight * lr_mul, bias * lr_mul).

    x: (..., in_dim); weight: (out_dim, in_dim) (PyTorch layout); bias: (out_dim,) or None.
    compute_dtype: optional reduced-precision MXU input dtype (e.g. jnp.bfloat16); the
    accumulation stays f32.  NOTE: the bf16 path changes numerics vs. the f32 reference.
    """
    *lead, in_dim = x.shape
    out_dim, in_dim_w = weight.shape
    assert in_dim == in_dim_w, "weight/input dim mismatch"
    lr_mul = float(lr_mul)
    out_dtype = x.dtype

    M = 1
    for d in lead:
        M *= d
    x2 = x.reshape(M, in_dim)

    # Optional reduced-precision MXU inputs (guarded: no-ops when dtypes already match).
    w2 = weight
    if compute_dtype is not None:
        if x2.dtype != compute_dtype:
            x2 = x2.astype(compute_dtype)
        if w2.dtype != compute_dtype:
            # TODO(synk): cache the cast/padded weight outside the hot path for repeated calls.
            w2 = w2.astype(compute_dtype)
    if w2.dtype != x2.dtype:
        w2 = w2.astype(x2.dtype)

    itemsize = x2.dtype.itemsize
    out_itemsize = jnp.dtype(out_dtype).itemsize
    row_align = max(8, 32 // itemsize)            # 8 rows f32, 16 bf16, 32 int8/fp8

    # Bias: pre-scale by lr_mul once (length-N vector, negligible) -> kernel epilogue is one add.
    if bias is None:
        b2 = jnp.zeros((1, out_dim), jnp.float32)
    else:
        b2 = bias.astype(jnp.float32).reshape(1, out_dim)
        if lr_mul != 1.0:
            b2 = b2 * lr_mul

    # Conservative double-buffered VMEM footprint of one grid step.
    def _blk_bytes(tm_, tn_, tk_):
        return 2 * (tm_ * tk_ * itemsize          # x block
                    + tn_ * tk_ * itemsize        # weight block
                    + tm_ * tn_ * out_itemsize    # out block
                    + tn_ * 4)                    # bias block (f32)

    # ---- balanced M tiling (sublane aligned) ----
    grid_m = _cdiv(M, tm)
    if grid_m == 1 and M >= 512:
        grid_m = 2     # v7x megacore: give both TensorCores a grid step (no-op on v5e/v6e)
    tm_eff = _round_up(_cdiv(M, grid_m), row_align)
    grid_m = _cdiv(M, tm_eff)
    Mp = grid_m * tm_eff

    cost = pl.CostEstimate(
        flops=int(2 * M * in_dim * out_dim),
        transcendentals=0,
        bytes_accessed=int(M * in_dim * itemsize + out_dim * in_dim * itemsize
                           + out_dim * 4 + M * out_dim * out_itemsize),
    )
    cparams = dict(vmem_limit_bytes=vmem_limit_bytes)

    # -------------------------------------------------------------------------
    # Path A: whole weight resident in VMEM (fetched once, revisited for all M tiles).
    # Shrink the M tile (not below 128 rows) before giving up residency.
    # -------------------------------------------------------------------------
    tm_a = tm_eff
    floor_m = max(128, row_align)
    while _blk_bytes(tm_a, out_dim, in_dim) > vmem_budget_bytes and tm_a > floor_m:
        tm_a = _round_up(max(tm_a // 2, floor_m), row_align)
    if _blk_bytes(tm_a, out_dim, in_dim) <= vmem_budget_bytes:
        tm_eff = tm_a
        grid_m = _cdiv(M, tm_eff)
        Mp = grid_m * tm_eff
        if Mp != M:                                   # guarded pad
            x2 = jnp.pad(x2, ((0, Mp - M), (0, 0)))

        out = pl.pallas_call(
            functools.partial(_equal_linear_kernel, lr_mul=lr_mul),
            out_shape=jax.ShapeDtypeStruct((Mp, out_dim), out_dtype),
            grid_spec=pltpu.PrefetchScalarGridSpec(
                num_scalar_prefetch=0,
                grid=(grid_m,),
                in_specs=[
                    pl.BlockSpec((tm_eff, in_dim), lambda i: (i, 0)),
                    pl.BlockSpec((out_dim, in_dim), lambda i: (0, 0)),  # resident W
                    pl.BlockSpec((1, out_dim), lambda i: (0, 0)),       # resident bias
                ],
                out_specs=pl.BlockSpec((tm_eff, out_dim), lambda i: (i, 0)),
            ),
            compiler_params=pltpu.CompilerParams(
                dimension_semantics=("parallel",), **cparams),
            cost_estimate=cost,
        )(x2, w2, b2)

        if Mp != M:                                   # guarded slice
            out = out[:M]
        return out.reshape(*lead, out_dim)

    # -------------------------------------------------------------------------
    # Path B: W too large to be resident -> tile N, keep K whole.  Grid order is chosen
    # so the smaller operand is the one that gets re-streamed from HBM.
    # -------------------------------------------------------------------------
    grid_n = max(1, _cdiv(out_dim, tn))
    tn_eff = _round_up(_cdiv(out_dim, grid_n), 128)
    while _blk_bytes(tm_eff, tn_eff, in_dim) > vmem_budget_bytes and tn_eff > 128:
        tn_eff = _round_up(max(tn_eff // 2, 128), 128)

    if _blk_bytes(tm_eff, tn_eff, in_dim) <= vmem_budget_bytes:
        grid_n = _cdiv(out_dim, tn_eff)
        Np = grid_n * tn_eff
        if Mp != M:
            x2 = jnp.pad(x2, ((0, Mp - M), (0, 0)))
        if Np != out_dim:
            w2 = jnp.pad(w2, ((0, Np - out_dim), (0, 0)))
            b2 = jnp.pad(b2, ((0, 0), (0, Np - out_dim)))

        if grid_m * Np <= grid_n * Mp:
            # x rows resident across inner N axis; W strips streamed once per M tile.
            grid = (grid_m, grid_n)
            x_map = lambda i, j: (i, 0)
            w_map = lambda i, j: (j, 0)
            b_map = lambda i, j: (0, j)
            o_map = lambda i, j: (i, j)
        else:
            # W strip resident across inner M axis; x streamed once per N tile.
            grid = (grid_n, grid_m)
            x_map = lambda j, i: (i, 0)
            w_map = lambda j, i: (j, 0)
            b_map = lambda j, i: (0, j)
            o_map = lambda j, i: (i, j)

        out = pl.pallas_call(
            functools.partial(_equal_linear_kernel, lr_mul=lr_mul),
            out_shape=jax.ShapeDtypeStruct((Mp, Np), out_dtype),
            grid_spec=pltpu.PrefetchScalarGridSpec(
                num_scalar_prefetch=0,
                grid=grid,
                in_specs=[
                    pl.BlockSpec((tm_eff, in_dim), x_map),
                    pl.BlockSpec((tn_eff, in_dim), w_map),
                    pl.BlockSpec((1, tn_eff), b_map),
                ],
                out_specs=pl.BlockSpec((tm_eff, tn_eff), o_map),
            ),
            compiler_params=pltpu.CompilerParams(
                dimension_semantics=("parallel", "parallel"), **cparams),
            cost_estimate=cost,
        )(x2, w2, b2)

        if Mp != M or Np != out_dim:
            out = out[:M, :out_dim]
        return out.reshape(*lead, out_dim)

    # -------------------------------------------------------------------------
    # Path C: very large in_dim -> also tile K (innermost, "arbitrary") with an f32
    # accumulator scratch; keeps tn a large multiple of 128 (lane-dense stores) while
    # bounding per-step VMEM so the same tiles work on v7x's 64 MiB.
    # -------------------------------------------------------------------------
    grid_k = max(1, _cdiv(in_dim, tk))
    tk_eff = _round_up(_cdiv(in_dim, grid_k), 128)
    while (_blk_bytes(tm_eff, tn_eff, tk_eff) + tm_eff * tn_eff * 4) > vmem_budget_bytes:
        if tk_eff > 512:
            tk_eff = _round_up(max(tk_eff // 2, 512), 128)
        elif tn_eff > 256:
            tn_eff = _round_up(max(tn_eff // 2, 256), 128)
        elif tm_eff > row_align:
            tm_eff = _round_up(max(tm_eff // 2, row_align), row_align)
        else:
            break

    grid_m = _cdiv(M, tm_eff)
    grid_n = _cdiv(out_dim, tn_eff)
    grid_k = _cdiv(in_dim, tk_eff)
    Mp, Np, Kp = grid_m * tm_eff, grid_n * tn_eff, grid_k * tk_eff

    if Mp != M or Kp != in_dim:
        x2 = jnp.pad(x2, ((0, Mp - M), (0, Kp - in_dim)))
    if Np != out_dim or Kp != in_dim:
        w2 = jnp.pad(w2, ((0, Np - out_dim), (0, Kp - in_dim)))
    if Np != out_dim:
        b2 = jnp.pad(b2, ((0, 0), (0, Np - out_dim)))

    out = pl.pallas_call(
        functools.partial(_equal_linear_kernel_ktiled, lr_mul=lr_mul),
        out_shape=jax.ShapeDtypeStruct((Mp, Np), out_dtype),
        grid_spec=pltpu.PrefetchScalarGridSpec(
            num_scalar_prefetch=0,
            grid=(grid_m, grid_n, grid_k),
            in_specs=[
                pl.BlockSpec((tm_eff, tk_eff), lambda i, j, k: (i, k)),
                pl.BlockSpec((tn_eff, tk_eff), lambda i, j, k: (j, k)),
                pl.BlockSpec((1, tn_eff), lambda i, j, k: (0, j)),
            ],
            out_specs=pl.BlockSpec((tm_eff, tn_eff), lambda i, j, k: (i, j)),
            scratch_shapes=[pltpu.VMEM((tm_eff, tn_eff), jnp.float32)],
        ),
        compiler_params=pltpu.CompilerParams(
            dimension_semantics=("parallel", "parallel", "arbitrary"), **cparams),
        cost_estimate=cost,
    )(x2, w2, b2)

    if Mp != M or Np != out_dim:
        out = out[:M, :out_dim]
    return out.reshape(*lead, out_dim)


def equal_linear_ref(x, weight, bias, lr_mul):
    return jnp.einsum("...i,oi->...o", x, weight * lr_mul) + bias * lr_mul


if __name__ == "__main__":
    key = jax.random.PRNGKey(0)

    # --- Test 1: small shapes from the module, resident-weight fast path ---
    B, S, in_dim, out_dim = 2, 8, 32, 64
    lr_mul = 0.5  # power of two -> scaling order matches PyTorch bit-for-bit
    kx, kw, kb, k2 = jax.random.split(key, 4)
    x = jax.random.normal(kx, (B, S, in_dim), dtype=jnp.float32)
    weight = jax.random.normal(kw, (out_dim, in_dim), dtype=jnp.float32)
    bias = jax.random.normal(kb, (out_dim,), dtype=jnp.float32) * 0.1

    out = jax.block_until_ready(equal_linear(x, weight, bias, lr_mul))
    ref = equal_linear_ref(x, weight, bias, lr_mul)
    assert out.shape == (B, S, out_dim)
    assert jnp.allclose(out, ref, atol=1e-5, rtol=1e-5), "mismatch (resident path)"

    # --- Test 2: force the tiled fallback (ragged M/N, K-tiled accumulator path) by
    # shrinking the artificial VMEM budget; same semantics, same weights layout. ---
    kx2, kw2, kb2 = jax.random.split(k2, 3)
    x_b = jax.random.normal(kx2, (3, 5, 160), dtype=jnp.float32)
    w_b = jax.random.normal(kw2, (200, 160), dtype=jnp.float32)
    b_b = jax.random.normal(kb2, (200,), dtype=jnp.float32) * 0.1
    out_b = jax.block_until_ready(
        equal_linear(x_b, w_b, b_b, 1.0, tk=128, vmem_budget_bytes=2048))
    ref_b = equal_linear_ref(x_b, w_b, b_b, 1.0)
    assert out_b.shape == (3, 5, 200)
    assert jnp.allclose(out_b, ref_b, atol=1e-4, rtol=1e-5), "mismatch (tiled path)"

    print("KERNEL_OK")
</pallas_src>

<mosaic_0001>
module attributes {stable_mosaic.version = 11 : i64} {
  func.func @_equal_linear_kernel(%arg0: i32, %arg1: memref<16x32xf32, #tpu.memory_space<vmem>>, %arg2: memref<64x32xf32, #tpu.memory_space<vmem>>, %arg3: memref<1x64xf32, #tpu.memory_space<vmem>>, %arg4: memref<16x64xf32, #tpu.memory_space<vmem>>) attributes {dimension_semantics = [#tpu.dimension_semantics<parallel>], iteration_bounds = array<i64: 1>, scalar_prefetch = 0 : i64, scratch_operands = 0 : i64, tpu.core_type = #tpu.core_type<tc>, window_params = [{transform_indices = @transform_0, window_bounds = array<i64: 16, 32>}, {pipeline_mode = #tpu.pipeline_mode<synchronous>, transform_indices = @transform_1, window_bounds = array<i64: 64, 32>}, {pipeline_mode = #tpu.pipeline_mode<synchronous>, transform_indices = @transform_2, window_bounds = array<i64: 1, 64>}, {transform_indices = @transform_3, window_bounds = array<i64: 16, 64>}]} {
    %c0 = arith.constant 0 : index
    %c0_0 = arith.constant 0 : index
    %0 = vector.load %arg1[%c0, %c0_0] : memref<16x32xf32, #tpu.memory_space<vmem>>, vector<16x32xf32>
    %c0_1 = arith.constant 0 : index
    %c0_2 = arith.constant 0 : index
    %1 = vector.load %arg2[%c0_1, %c0_2] : memref<64x32xf32, #tpu.memory_space<vmem>>, vector<64x32xf32>
    %cst = arith.constant dense<0.000000e+00> : vector<16x64xf32>
    %2 = tpu.matmul %0, %1, %cst {dimension_numbers = #tpu.dot_dimension_numbers<[1], [1], [0], [0], [0, 0, 1, 0], [], []>} : vector<16x32xf32>, vector<64x32xf32>, vector<16x64xf32> -> vector<16x64xf32>
    %cst_3 = arith.constant 5.000000e-01 : f32
    %3 = vector.broadcast %cst_3 : f32 to vector<16x64xf32>
    %4 = arith.mulf %2, %3 : vector<16x64xf32>
    %c0_4 = arith.constant 0 : index
    %c0_5 = arith.constant 0 : index
    %5 = vector.load %arg3[%c0_4, %c0_5] : memref<1x64xf32, #tpu.memory_space<vmem>>, vector<1x64xf32>
    %6 = vector.broadcast %5 : vector<1x64xf32> to vector<16x64xf32>
    %7 = arith.addf %4, %6 : vector<16x64xf32>
    %c0_6 = arith.constant 0 : index
    %c0_7 = arith.constant 0 : index
    %8 = vector.load %arg4[%c0_6, %c0_7] : memref<16x64xf32, #tpu.memory_space<vmem>>, vector<16x64xf32>
    tpu.vector_store %arg4[%c0_6, %c0_7], %7 {strides = array<i32>} : memref<16x64xf32, #tpu.memory_space<vmem>>, vector<16x64xf32>,
    return
  }
  func.func @transform_0(%arg0: i32) -> (i32, i32) {
    %c0_i32 = arith.constant 0 : i32
    %c0_i32_0 = arith.constant 0 : i32
    return %arg0, %c0_i32 : i32, i32
  }
  func.func @transform_1(%arg0: i32) -> (i32, i32) {
    %c0_i32 = arith.constant 0 : i32
    %c0_i32_0 = arith.constant 0 : i32
    %c0_i32_1 = arith.constant 0 : i32
    return %c0_i32, %c0_i32_0 : i32, i32
  }
  func.func @transform_2(%arg0: i32) -> (i32, i32) {
    %c0_i32 = arith.constant 0 : i32
    %c0_i32_0 = arith.constant 0 : i32
    %c0_i32_1 = arith.constant 0 : i32
    return %c0_i32, %c0_i32_0 : i32, i32
  }
  func.func @transform_3(%arg0: i32) -> (i32, i32) {
    %c0_i32 = arith.constant 0 : i32
    %c0_i32_0 = arith.constant 0 : i32
    return %arg0, %c0_i32 : i32, i32
  }
}

</mosaic_0001>

<llo_original>
// kernel: tpu_custom_call.1
$region0: #{tpu_custom_call.1}
  #allocation0 [shape = 'u32[]', space=smem, size = 0x4, offset = 0x4, fixed_abs, tag = 'smem constant byte address 0x4 - core index']
  #allocation1 [shape = 'u32[144,128]{1,0:T(1,128)}', space=vmem, size = 0x12000, scoped, tag = 'internal scratch']
  %s0 = inlined_call_operand.vmem [shape: f32[16,32], index: 0, kind: input, shape index: {}]
  %s1 = inlined_call_operand.vmem [shape: f32[64,32], index: 1, kind: input, shape index: {}]
  %s2 = inlined_call_operand.vmem [shape: f32[1,64], index: 2, kind: input, shape index: {}]
  %s3 = inlined_call_operand.hbm [shape: f32[16,64], index: 3, kind: output, shape index: {}]
  %s4 = sld [smem:[#allocation0]]
  $region22: #{tpu_custom_call.1} parent=0
    _
  %s6 = ssub.s32 1, %s4
  %s7 = scalar_select 0, %s6, %s4
  $region1: #{tpu_custom_call.1} parent=0
    #allocation2 [shape = 'u8[8192]{0}', space=vmem, size = 0x2000, scoped, tag = 'output window, operand 0, single buffered']
    #allocation3 [shape = 's32[1]{0}', space=sflag, size = 0x4, scoped, tag = 'scoped memory for tpu_custom_call.1']
    %8 = vsyncpa [#allocation3], 0
    // Predicated region
    $region2: #{tpu_custom_call.1} parent=1 // pred_check
      _
    $region3: #{tpu_custom_call.1} parent=1 // pred_check_branch
      %10 = sbr.rel (0) target = $region5
    $region4: #{tpu_custom_call.1} parent=1 // pred_region
      _
    $region5: #{tpu_custom_call.1} parent=1 // pred_fallthru
      _
    // Predicated region
    $region6: #{tpu_custom_call.1} parent=1 // pred_check
      _
    $region7: #{tpu_custom_call.1} parent=1 // pred_check_branch
      %12 = sbr.rel (0) target = $region9
    $region8: #{tpu_custom_call.1} parent=1 // pred_region
      _
    $region9: #{tpu_custom_call.1} parent=1 // pred_fallthru
      _
    // Predicated region
    $region10: #{tpu_custom_call.1} parent=1 // pred_check
      _
    $region11: #{tpu_custom_call.1} parent=1 // pred_check_branch
      %14 = sbr.rel (0) target = $region13
    $region12: #{tpu_custom_call.1} parent=1 // pred_region
      _
    $region13: #{tpu_custom_call.1} parent=1 // pred_fallthru
      _
    %v15 = vld [vmem:[%s0] sm:$0xff]
    %v16 = vld [vmem:[%s0 + $0x8] sm:$0xff]
    %v17 = vld [vmem:[%s1] sm:$0xff]
    %v18 = vld [vmem:[%s1 + $0x8] sm:$0xff]
    %v19 = vld [vmem:[%s1 + $0x10] sm:$0xff]
    %v20 = vld [vmem:[%s1 + $0x18] sm:$0xff]
    %v21 = vld [vmem:[%s1 + $0x20] sm:$0xff]
    %v22 = vld [vmem:[%s1 + $0x28] sm:$0xff]
    %v23 = vld [vmem:[%s1 + $0x30] sm:$0xff]
    %v24 = vld [vmem:[%s1 + $0x38] sm:$0xff]
    %vm25 = vcmask 261120
    %v27 = vsel %vm25, %v15, 0
    %v30 = vsel %vm25, %v16, 0
    %v33 = vsel %vm25, %v17, 0
    %v36 = vsel %vm25, %v18, 0
    %v39 = vsel %vm25, %v19, 0
    %v42 = vsel %vm25, %v20, 0
    %v45 = vsel %vm25, %v21, 0
    %v48 = vsel %vm25, %v22, 0
    %v51 = vsel %vm25, %v23, 0
    %v54 = vsel %vm25, %v24, 0
    %56 = vmatprep.subr.mxu0 0.0
    %57 = vmatpush1.xpose.msra.mxu0 %v33
    %58 = vmatprep.subr.mxu0 0.0
    %59 = vmatpush1.xpose.msra.mxu0 %v36
    %60 = vmatprep.subr.mxu0 0.0
    %61 = vmatpush1.xpose.msra.mxu0 %v39
    %62 = vmatprep.subr.mxu0 0.0
    %63 = vmatpush1.xpose.msra.mxu0 %v42
    %64 = vmatprep.subr.mxu0 0.0
    %65 = vmatpush1.xpose.msra.mxu0 %v45
    %66 = vmatprep.subr.mxu0 0.0
    %67 = vmatpush1.xpose.msra.mxu0 %v48
    %68 = vmatprep.subr.mxu0 0.0
    %69 = vmatpush1.xpose.msra.mxu0 %v51
    %70 = vmatprep.subr.mxu0 0.0
    %71 = vmatpush1.xpose.msra.mxu0 %v54
    %72 = vmatprep.subr.mxu0 0.0
    %73 = vmatpush1.xpose.msra.mxu0 0.0
    %74 = vmatprep.subr.mxu0 0.0
    %75 = vmatpush1.xpose.msra.mxu0 0.0
    %76 = vmatprep.subr.mxu0 0.0
    %77 = vmatpush1.xpose.msra.mxu0 0.0
    %78 = vmatprep.subr.mxu0 0.0
    %79 = vmatpush1.xpose.msra.mxu0 0.0
    %80 = vmatprep.subr.mxu0 0.0
    %81 = vmatpush1.xpose.msra.mxu0 0.0
    %82 = vmatprep.subr.mxu0 0.0
    %83 = vmatpush1.xpose.msra.mxu0 0.0
    %84 = vmatprep.subr.mxu0 0.0
    %85 = vmatpush1.xpose.msra.mxu0 0.0
    %86 = vmatprep.subr.mxu0 0.0
    %87 = vmatpush1.xpose.msra.mxu0 0.0
    %88 = vmatprep.subr.mxu0 0.0
    %89 = vmatpush1.xpose.msra.mxu0 0.0
    %90 = vmatprep.subr.mxu0 0.0
    %91 = vmatpush1.xpose.msra.mxu0 0.0
    %92 = vmatprep.subr.mxu0 0.0
    %93 = vmatpush1.xpose.msra.mxu0 0.0
    %94 = vmatprep.subr.mxu0 0.0
    %95 = vmatpush1.xpose.msra.mxu0 0.0
    %96 = vmatprep.subr.mxu0 0.0
    %97 = vmatpush1.xpose.msra.mxu0 0.0
    %98 = vmatprep.subr.mxu0 0.0
    %99 = vmatpush1.xpose.msra.mxu0 0.0
    %100 = vmatprep.subr.mxu0 0.0
    %101 = vmatpush1.xpose.msra.mxu0 0.0
    %102 = vmatprep.subr.mxu0 0.0
    %103 = vmatpush1.xpose.msra.mxu0 0.0
    %104 = vmatprep.subr.mxu0 0.0
    %105 = vmatpush1.xpose.msra.mxu0 0.0
    %106 = vmatprep.subr.mxu0 0.0
    %107 = vmatpush1.xpose.msra.mxu0 0.0
    %108 = vmatprep.subr.mxu0 0.0
    %109 = vmatpush1.xpose.msra.mxu0 0.0
    %110 = vmatprep.subr.mxu0 0.0
    %111 = vmatpush1.xpose.msra.mxu0 0.0
    %112 = vmatprep.subr.mxu0 0.0
    %113 = vmatpush1.xpose.msra.mxu0 0.0
    %114 = vmatprep.subr.mxu0 0.0
    %115 = vmatpush1.xpose.msra.mxu0 0.0
    %116 = vmatprep.subr.mxu0 0.0
    %117 = vmatpush1.xpose.msra.mxu0 0.0
    %118 = vmatprep.subr.mxu0 0.0
    %119 = vmatpush1.xpose.msra.mxu0 0.0
    %120 = vmatprep.mubr.f32.mxu0 0.0
    %121 = vmatmul.mubr.f32.gmra.mrb[0].mxu0 %v27
    %v122 = vpop.f32.mrb[0].mxu0
    %v123 = vadd.f32 0.0, %v122
    %v124 = vpop.f32.mrb[0].mxu0
    %125 = vmatprep.mubr.f32.mxu0 0.0
    %126 = vmatmul.mubr.f32.gmra.mrb[0].mxu0 %v30
    %v127 = vpop.f32.mrb[0].mxu0
    %v128 = vadd.f32 0.0, %v127
    %v129 = vpop.f32.mrb[0].mxu0
    %130 = vdwg.mxu0
    %v131 = vmul.f32 %v123, 0.5
    %v132 = vmul.f32 %v128, 0.5
    %v133 = vld [vmem:[%s2] sm:$0x1]
    %v135 = vlaneseq
    %v136 = vshrl.u32 %v135, 7
    %v137 = vsub.s32 0, %v136
    %v138 = vrot.slane %v133, %v137
    %v140 = vadd.f32 %v131, %v138
    %v141 = vadd.f32 %v132, %v138
    %vm142 = vcmask 523264
    %143 = vst.msk [vmem:[#allocation2] sm:$0xff] %vm142, %v140
    %144 = vst.msk [vmem:[#allocation2 + $0x8] sm:$0xff] %vm142, %v141
    // Predicated region
    $region14: #{tpu_custom_call.1} parent=1 // pred_check
      _
    $region15: #{tpu_custom_call.1} parent=1 // pred_check_branch
      %146 = sbr.rel (0) target = $region17
    $region16: #{tpu_custom_call.1} parent=1 // pred_region
      %s148 = ssub.s32 256, 256
      %149 = vsyncadd [#allocation3], %s148
      %s150 = sshll.u32 [#allocation2], 4
      %s151 = int_to_ptr.vmem [resolvable:$true] %s150
      %156 = dma.vmem_to_hbm [thread:$0]  %s151, 256, %s3, [#allocation3], 128, 128, 8
    $region17: #{tpu_custom_call.1} parent=1 // pred_fallthru
      _
    // Predicated region
    $region18: #{tpu_custom_call.1} parent=1 // pred_check
      _
    $region19: #{tpu_custom_call.1} parent=1 // pred_check_branch
      %158 = sbr.rel (0) target = $region21
    $region20: #{tpu_custom_call.1} parent=1 // pred_region
      %159 = dma.done [#allocation3], 256
    $region21: #{tpu_custom_call.1} parent=1 // pred_fallthru
      _
    %160 = vsyncpa [#allocation3], 1

</llo_original>
